<compile_context>
chip_gen: v7x
topology: tpu7x:2x2x1
jax: 0.10.0
libtpu: 0.0.40
codegen_flags: <defaults>
</compile_context>

<pallas_src>
import numpy as np
import jax
import jax.numpy as jnp
from jax import lax
from jax.experimental import pallas as pl
from jax.experimental.pallas import tpu as pltpu


_SMEM_SPEC = pl.BlockSpec(memory_space=pltpu.MemorySpace.SMEM)
_COMPILER_PARAMS = pltpu.CompilerParams(
    dimension_semantics=("parallel",),
    vmem_limit_bytes=32 * 1024 * 1024,
)


def _act_spec(c, p):
    return pl.BlockSpec((1, c, p), lambda b: (b, 0, 0))


def _const_spec(shape):
    nd = len(shape)
    return pl.BlockSpec(shape, lambda b, _nd=nd: (0,) * _nd)


# ---------------------------------------------------------------------------
# In-kernel building blocks.  Activations are 2-D (C, P) f32 tiles, P = H*W
# flattened row-major (spatial on the 128-wide lane axis).
# ---------------------------------------------------------------------------
def _shift_lanes(x, s):
    """out[:, q] = x[:, q + s], zero-filled outside [0, P).  `s` is static."""
    c, p = x.shape
    if s == 0:
        return x
    if abs(s) >= p:
        return jnp.zeros_like(x)
    pad = jnp.zeros((c, abs(s)), x.dtype)
    if s > 0:
        return jnp.concatenate([x[:, s:], pad], axis=-1)
    return jnp.concatenate([pad, x[:, :p + s]], axis=-1)


def _tap(x, dy, dx, w, msk):
    """Flattened-image shift by (dy, dx) with zero boundary.

    Row (dy) boundaries are handled by the zero fill of the lane shift; column
    (dx) boundaries need the precomputed masks (row 0 = left-valid, 1 = right-valid).
    """
    s = dy * w + dx
    if abs(s) >= x.shape[-1]:
        return jnp.zeros_like(x)
    v = _shift_lanes(x, s)
    if dx == -1:
        v = v * msk[0:1]
    elif dx == 1:
        v = v * msk[1:2]
    return v


def _inorm(v):
    """Affine-free instance norm of a (C, P) tile over the lane axis."""
    p = v.shape[-1]
    inv = 1.0 / p
    s1 = jnp.sum(v, axis=-1, keepdims=True)
    s2 = jnp.sum(v * v, axis=-1, keepdims=True)
    mean = s1 * inv
    var = jnp.maximum(s2 * inv - mean * mean, 0.0)
    return (v - mean) * lax.rsqrt(var + 1e-5)


def _inorm_parity(v, c):
    """Instance norm of a parity-stacked (4*C, Pin) tile (spatial size = 4*Pin)."""
    p = v.shape[-1]
    inv = 1.0 / (4.0 * p)
    s1 = jnp.sum(v, axis=-1, keepdims=True)
    s2 = jnp.sum(v * v, axis=-1, keepdims=True)
    s1 = s1[0:c] + s1[c:2 * c] + s1[2 * c:3 * c] + s1[3 * c:4 * c]
    s2 = s2[0:c] + s2[c:2 * c] + s2[2 * c:3 * c] + s2[3 * c:4 * c]
    mean = s1 * inv
    var = jnp.maximum(s2 * inv - mean * mean, 0.0)
    scale = lax.rsqrt(var + 1e-5)
    mean4 = jnp.concatenate([mean] * 4, axis=0)
    scale4 = jnp.concatenate([scale] * 4, axis=0)
    return (v - mean4) * scale4


def _prelu(v, a):
    return jnp.where(v >= 0.0, v, a * v)


def _transposed_conv(z, wt, w, msk):
    """Sub-pixel stride-2 transposed conv.

    z: (Cin, Pin) input (Cin = running + skip channels), wt: (4*Cout, 4*Cin) packed
    weight.  Returns the 4 output-parity planes stacked on sublanes: (4*Cout, Pin).
    """
    s = jnp.concatenate(
        [z,
         _tap(z, 0, 1, w, msk),
         _tap(z, 1, 0, w, msk),
         _tap(z, 1, 1, w, msk)],
        axis=0)                                         # (4*Cin, Pin)
    return jnp.dot(wt, s, preferred_element_type=jnp.float32)


def _conv3x3(t, wc, w, msk):
    """3x3 'same' conv as one matmul: stack the 9 shifted taps along K."""
    taps = [_tap(t, dy, dx, w, msk) for dy in (-1, 0, 1) for dx in (-1, 0, 1)]
    s = jnp.concatenate(taps, axis=0)                   # (9*C, P)
    return jnp.dot(wc, s, preferred_element_type=jnp.float32)


# ---------------------------------------------------------------------------
# Kernels (grid = batch).
# ---------------------------------------------------------------------------
def _make_head_kernel(cout, w):
    """Stage-0 transposed conv + InstanceNorm + PReLU -> parity planes."""
    def kernel(x_ref, xe_ref, msk_ref, wt_ref, a_ref, tpar_ref):
        msk = msk_ref[...]
        z = jnp.concatenate([x_ref[0], xe_ref[0]], axis=0)
        y = _transposed_conv(z, wt_ref[...], w, msk)
        tpar_ref[0] = _prelu(_inorm_parity(y, cout), a_ref[0])
    return kernel


def _make_mid_kernel(c_next, w):
    """Stage-i ConvUnit (+residual) fused with stage-(i+1) transposed conv+IN+PReLU."""
    def kernel(t_ref, xe_ref, msk_ref, wc_ref, wt_ref, a_ref, u_ref, tpar_ref):
        msk = msk_ref[...]
        t = t_ref[0]
        r = _conv3x3(t, wc_ref[...], w, msk)             # bias dropped: cancelled by IN
        u = _prelu(_inorm(r), a_ref[0]) + t
        u_ref[0] = u
        z = jnp.concatenate([u, xe_ref[0]], axis=0)
        y = _transposed_conv(z, wt_ref[...], w, msk)     # bias dropped: cancelled by IN
        tpar_ref[0] = _prelu(_inorm_parity(y, c_next), a_ref[1])
    return kernel


def _make_tail_kernel(w):
    """Top-stage ConvUnit: conv + bias (no norm/act) + identity residual."""
    def kernel(t_ref, msk_ref, wc_ref, bc_ref, out_ref):
        t = t_ref[0]
        r = _conv3x3(t, wc_ref[...], w, msk_ref[...]) + bc_ref[...]
        out_ref[0] = r + t
    return kernel


def _parity_to_rowmajor(tpar, cout, h, w):
    """XLA pixel-shuffle: (N, 4*Cout, h*w) parity planes -> (N, Cout, (2h)*(2w))."""
    n = tpar.shape[0]
    t = tpar.reshape(n, 2, 2, cout, h, w)                # (n, py, px, c, i, j)
    t = jnp.transpose(t, (0, 3, 4, 1, 5, 2))             # (n, c, i, py, j, px)
    return t.reshape(n, cout, 4 * h * w)


# ---------------------------------------------------------------------------
# Pure-JAX reference (NCHW), used only for the sanity check.
# ---------------------------------------------------------------------------
def _inorm_ref(v):
    m = jnp.mean(v, axis=(2, 3), keepdims=True)
    var = jnp.mean(jnp.square(v - m), axis=(2, 3), keepdims=True)
    return (v - m) * lax.rsqrt(var + 1e-5)


def _prelu_ref(v, a):
    return jnp.where(v >= 0, v, a * v)


def _up_block_ref(x, xe, params, *, stride, is_top):
    wt, bt, a1, wc, bc, a2 = params
    z = jnp.concatenate([x, xe], axis=1)
    dn = ("NCHW", "HWIO", "NCHW")
    wt_hwio = jnp.transpose(wt[:, :, ::-1, ::-1], (2, 3, 0, 1))
    t = lax.conv_general_dilated(z, wt_hwio, (1, 1),
                                 [(1, stride), (1, stride)],
                                 lhs_dilation=(stride, stride),
                                 dimension_numbers=dn) + bt.reshape(1, -1, 1, 1)
    t = _prelu_ref(_inorm_ref(t), a1)
    wc_hwio = jnp.transpose(wc, (2, 3, 1, 0))
    r = lax.conv_general_dilated(t, wc_hwio, (1, 1), [(1, 1), (1, 1)],
                                 dimension_numbers=dn) + bc.reshape(1, -1, 1, 1)
    if not is_top:
        r = _prelu_ref(_inorm_ref(r), a2)
    return r + t


# ---------------------------------------------------------------------------
# Decoder
# ---------------------------------------------------------------------------
class DecoderPallas:
    """Pallas port of Decoder (spatial_dims=2, num_res_units=2, PReLU,
    affine-free InstanceNorm, dropout=0, bias=True, adn_ordering='NDA')."""

    def __init__(self, key, out_channels, channels, strides):
        c_ins = [channels[0] + channels[1]] + [2 * c for c in channels[2:]]
        c_outs = list(channels[2:]) + [out_channels]
        self.num_decoders = len(channels) - 1
        self.strides = tuple(strides)
        assert len(self.strides) == self.num_decoders
        self.c_outs = c_outs

        self.params = []     # PyTorch-layout parameters (reference only)
        self.kparams = []    # packed kernel-layout parameters
        for cin, cout in zip(c_ins, c_outs):
            key, k0, k1, k2, k3 = jax.random.split(key, 5)
            wt = 0.2 * jax.random.normal(k0, (cin, cout, 3, 3), jnp.float32)   # ConvT (in,out,kH,kW)
            bt = 0.1 * jax.random.normal(k1, (cout,), jnp.float32)
            wc = 0.2 * jax.random.normal(k2, (cout, cout, 3, 3), jnp.float32)  # Conv (out,in,kH,kW)
            bc = 0.1 * jax.random.normal(k3, (cout,), jnp.float32)
            a1 = jnp.float32(0.25)          # nn.PReLU default shared slope
            a2 = jnp.float32(0.25)
            self.params.append((wt, bt, a1, wc, bc, a2))

            # --- packed transposed-conv weight: (4*Cout, 4*Cin) ------------
            # rows = output parity (yy, yx) blocks; cols = tap variants
            # [no shift | +col | +row | +row+col] of cat([x, x_e]).
            def blk(kh, kw, _wt=wt):
                return jnp.transpose(_wt[:, :, kh, kw])            # (cout, cin)
            zero = jnp.zeros((cout, cin), jnp.float32)
            wt_pack = jnp.concatenate([
                jnp.concatenate([blk(1, 1), zero,      zero,      zero],      axis=1),
                jnp.concatenate([blk(1, 2), blk(1, 0), zero,      zero],      axis=1),
                jnp.concatenate([blk(2, 1), zero,      blk(0, 1), zero],      axis=1),
                jnp.concatenate([blk(2, 2), blk(2, 0), blk(0, 2), blk(0, 0)], axis=1),
            ], axis=0)

            # --- packed residual-conv weight: (Cout, 9*Cout), tap (dy,dx) order
            wc_pack = jnp.concatenate(
                [wc[:, :, dy + 1, dx + 1] for dy in (-1, 0, 1) for dx in (-1, 0, 1)],
                axis=1)

            self.kparams.append(dict(wt=wt_pack, wc=wc_pack,
                                     bc=bc.reshape(cout, 1), a1=a1, a2=a2))
        self._mask_cache = {}

    # left/right column-validity masks for one resolution (shared per call).
    def _masks(self, h, w):
        key = (h, w)
        if key not in self._mask_cache:
            col = np.arange(h * w) % w
            left = (col >= 1).astype(np.float32)
            right = (col <= w - 2).astype(np.float32)
            self._mask_cache[key] = jnp.asarray(np.stack([left, right]))
        return self._mask_cache[key]

    # ---- pallas_call wrappers -------------------------------------------
    def _head_call(self, x, xe, msk, wt, a, cout, w):
        n, _, p = x.shape
        return pl.pallas_call(
            _make_head_kernel(cout, w),
            out_shape=jax.ShapeDtypeStruct((n, 4 * cout, p), jnp.float32),
            grid=(n,),
            in_specs=[_act_spec(x.shape[1], p), _act_spec(xe.shape[1], p),
                      _const_spec(msk.shape), _const_spec(wt.shape), _SMEM_SPEC],
            out_specs=_act_spec(4 * cout, p),
            compiler_params=_COMPILER_PARAMS,
        )(x, xe, msk, wt, a)

    def _mid_call(self, t, xe, msk, wc, wt, a, c_mid, c_next, w):
        n, _, p = t.shape
        return pl.pallas_call(
            _make_mid_kernel(c_next, w),
            out_shape=(jax.ShapeDtypeStruct((n, c_mid, p), jnp.float32),
                       jax.ShapeDtypeStruct((n, 4 * c_next, p), jnp.float32)),
            grid=(n,),
            in_specs=[_act_spec(c_mid, p), _act_spec(xe.shape[1], p),
                      _const_spec(msk.shape), _const_spec(wc.shape),
                      _const_spec(wt.shape), _SMEM_SPEC],
            out_specs=(_act_spec(c_mid, p), _act_spec(4 * c_next, p)),
            compiler_params=_COMPILER_PARAMS,
        )(t, xe, msk, wc, wt, a)

    def _tail_call(self, t, msk, wc, bc, c, w):
        n, _, p = t.shape
        return pl.pallas_call(
            _make_tail_kernel(w),
            out_shape=jax.ShapeDtypeStruct((n, c, p), jnp.float32),
            grid=(n,),
            in_specs=[_act_spec(c, p), _const_spec(msk.shape),
                      _const_spec(wc.shape), _const_spec(bc.shape)],
            out_specs=_act_spec(c, p),
            compiler_params=_COMPILER_PARAMS,
        )(t, msk, wc, bc)

    # ---- forward ----------------------------------------------------------
    def __call__(self, features):
        """features = [x0..x5] (NCHW). Returns [*features, u4, u3, u2, u1, logit]."""
        x0, x1, x2, x3, x4, x5 = features
        n = x5.shape[0]
        skips = [x4, x3, x2, x1, x0]
        nd = self.num_decoders
        couts = self.c_outs

        # per-stage input geometry
        h, w = x5.shape[2], x5.shape[3]
        geoms = []
        for s, xe in zip(self.strides, skips):
            # TODO(synk): only the module-default stride-2 / k=3 / pad=1 /
            # output_padding=1 Up configuration is implemented.
            assert s == 2
            assert xe.shape[2:] == (h, w)
            geoms.append((h, w))
            h, w = 2 * h, 2 * w

        def flat(a):
            return a.reshape(a.shape[0], a.shape[1], -1)

        # ---- stage 0: transposed conv + IN + PReLU ----
        hi, wi = geoms[0]
        kp0 = self.kparams[0]
        tpar = self._head_call(flat(x5), flat(skips[0]), self._masks(hi, wi),
                               kp0["wt"], jnp.stack([kp0["a1"]]), couts[0], wi)
        t = _parity_to_rowmajor(tpar, couts[0], hi, wi)

        outs = []
        # ---- stages 0..nd-2 ConvUnit fused with next stage's transposed conv ----
        for i in range(nd - 1):
            ho, wo = 2 * geoms[i][0], 2 * geoms[i][1]
            kpi, kpn = self.kparams[i], self.kparams[i + 1]
            slopes = jnp.stack([kpi["a2"], kpn["a1"]])
            u, tpar = self._mid_call(t, flat(skips[i + 1]), self._masks(ho, wo),
                                     kpi["wc"], kpn["wt"], slopes,
                                     couts[i], couts[i + 1], wo)
            outs.append(u.reshape(n, couts[i], ho, wo))
            t = _parity_to_rowmajor(tpar, couts[i + 1], ho, wo)

        # ---- top stage ConvUnit (conv + bias only) ----
        ho, wo = 2 * geoms[-1][0], 2 * geoms[-1][1]
        kpl = self.kparams[-1]
        logit = self._tail_call(t, self._masks(ho, wo), kpl["wc"], kpl["bc"],
                                couts[-1], wo)
        outs.append(logit.reshape(n, couts[-1], ho, wo))
        return [*features, *outs]

    def reference(self, features):
        x0, x1, x2, x3, x4, x5 = features
        skips = [x4, x3, x2, x1, x0]
        outs, x = [], x5
        for i, (p, s, xe) in enumerate(zip(self.params, self.strides, skips)):
            x = _up_block_ref(x, xe, p, stride=s,
                              is_top=(i == self.num_decoders - 1))
            outs.append(x)
        return [*features, *outs]


if __name__ == "__main__":
    key = jax.random.PRNGKey(0)
    n, out_channels = 2, 3
    channels = (16, 8, 8, 8, 4, 4)      # channels of x5, x4, x3, x2, x1, x0
    strides = (2, 2, 2, 2, 2)
    # Up concatenates BEFORE the transposed conv, so x5/x4 share the smallest
    # resolution; every later skip is 2x larger.
    spatial = {"x0": 16, "x1": 8, "x2": 4, "x3": 2, "x4": 1, "x5": 1}
    chans = {"x5": channels[0], "x4": channels[1], "x3": channels[2],
             "x2": channels[3], "x1": channels[4], "x0": channels[5]}

    key, *fkeys = jax.random.split(key, 7)
    feats = []
    for k, name in zip(fkeys, ["x0", "x1", "x2", "x3", "x4", "x5"]):
        s = spatial[name]
        feats.append(jax.random.normal(k, (n, chans[name], s, s), jnp.float32))

    key, pkey = jax.random.split(key)
    dec = DecoderPallas(pkey, out_channels, channels, strides)

    outs = jax.block_until_ready(dec(feats))        # Pallas decoder (6 fused calls)
    refs = dec.reference(feats)                     # pure-JAX (XLA) reference
    for o, r in zip(outs[6:], refs[6:]):
        err = float(jnp.max(jnp.abs(o - r)))
        scale = max(float(jnp.max(jnp.abs(r))), 1.0)
        assert err <= 2e-3 * scale, f"Pallas/reference mismatch: {err} (scale {scale})"

    print("KERNEL_OK")
</pallas_src>

<mosaic_0001>
module attributes {stable_mosaic.version = 11 : i64} {
  func.func @kernel(%arg0: i32, %arg1: memref<1x16x1xf32, #tpu.memory_space<vmem>>, %arg2: memref<1x8x1xf32, #tpu.memory_space<vmem>>, %arg3: memref<2x1xf32, #tpu.memory_space<vmem>>, %arg4: memref<32x96xf32, #tpu.memory_space<vmem>>, %arg5: memref<1xf32, #tpu.memory_space<smem>>, %arg6: memref<1x32x1xf32, #tpu.memory_space<vmem>>) attributes {dimension_semantics = [#tpu.dimension_semantics<parallel>], iteration_bounds = array<i64: 2>, scalar_prefetch = 0 : i64, scratch_operands = 0 : i64, tpu.core_type = #tpu.core_type<tc>, window_params = [{transform_indices = @transform_0, window_bounds = array<i64: 1, 16, 1>}, {transform_indices = @transform_1, window_bounds = array<i64: 1, 8, 1>}, {pipeline_mode = #tpu.pipeline_mode<synchronous>, transform_indices = @transform_2, window_bounds = array<i64: 2, 1>}, {pipeline_mode = #tpu.pipeline_mode<synchronous>, transform_indices = @transform_3, window_bounds = array<i64: 32, 96>}, {transform_indices = @transform_4, window_bounds = array<i64: 1>}, {transform_indices = @transform_5, window_bounds = array<i64: 1, 32, 1>}]} {
    %c0 = arith.constant 0 : index
    %c0_0 = arith.constant 0 : index
    %c0_1 = arith.constant 0 : index
    %0 = vector.load %arg1[%c0, %c0_0, %c0_1] : memref<1x16x1xf32, #tpu.memory_space<vmem>>, vector<1x16x1xf32>
    %1 = vector.shape_cast %0 : vector<1x16x1xf32> to vector<16x1xf32>
    %c0_2 = arith.constant 0 : index
    %c0_3 = arith.constant 0 : index
    %c0_4 = arith.constant 0 : index
    %2 = vector.load %arg2[%c0_2, %c0_3, %c0_4] : memref<1x8x1xf32, #tpu.memory_space<vmem>>, vector<1x8x1xf32>
    %3 = vector.shape_cast %2 : vector<1x8x1xf32> to vector<8x1xf32>
    %4 = tpu.concatenate %1, %3 in 0 : vector<16x1xf32>, vector<8x1xf32> -> vector<24x1xf32>
    %c0_5 = arith.constant 0 : index
    %c0_6 = arith.constant 0 : index
    %5 = vector.load %arg4[%c0_5, %c0_6] : memref<32x96xf32, #tpu.memory_space<vmem>>, vector<32x96xf32>
    %cst = arith.constant 0.000000e+00 : f32
    %6 = vector.broadcast %cst : f32 to vector<24x1xf32>
    %cst_7 = arith.constant 0.000000e+00 : f32
    %7 = vector.broadcast %cst_7 : f32 to vector<24x1xf32>
    %cst_8 = arith.constant 0.000000e+00 : f32
    %8 = vector.broadcast %cst_8 : f32 to vector<24x1xf32>
    %9 = tpu.concatenate %4, %6, %7, %8 in 0 : vector<24x1xf32>, vector<24x1xf32>, vector<24x1xf32>, vector<24x1xf32> -> vector<96x1xf32>
    %cst_9 = arith.constant dense<0.000000e+00> : vector<32x1xf32>
    %10 = tpu.matmul %5, %9, %cst_9 {dimension_numbers = #tpu.dot_dimension_numbers<[1], [0], [0], [1], [0, 0, 1, 1], [], []>} : vector<32x96xf32>, vector<96x1xf32>, vector<32x1xf32> -> vector<32x1xf32>
    %cst_10 = arith.constant dense<0.000000e+00> : vector<32xf32>
    %11 = vector.multi_reduction <add>, %10, %cst_10 [1] : vector<32x1xf32> to vector<32xf32>
    %12 = vector.shape_cast %11 : vector<32xf32> to vector<32x1xf32>
    %13 = arith.mulf %10, %10 : vector<32x1xf32>
    %cst_11 = arith.constant dense<0.000000e+00> : vector<32xf32>
    %14 = vector.multi_reduction <add>, %13, %cst_11 [1] : vector<32x1xf32> to vector<32xf32>
    %15 = vector.shape_cast %14 : vector<32xf32> to vector<32x1xf32>
    %16 = vector.extract_strided_slice %12 {offsets = [0, 0], sizes = [8, 1], strides = [1, 1]} : vector<32x1xf32> to vector<8x1xf32>
    %17 = vector.extract_strided_slice %12 {offsets = [8, 0], sizes = [8, 1], strides = [1, 1]} : vector<32x1xf32> to vector<8x1xf32>
    %18 = arith.addf %16, %17 : vector<8x1xf32>
    %19 = vector.extract_strided_slice %12 {offsets = [16, 0], sizes = [8, 1], strides = [1, 1]} : vector<32x1xf32> to vector<8x1xf32>
    %20 = arith.addf %18, %19 : vector<8x1xf32>
    %21 = vector.extract_strided_slice %12 {offsets = [24, 0], sizes = [8, 1], strides = [1, 1]} : vector<32x1xf32> to vector<8x1xf32>
    %22 = arith.addf %20, %21 : vector<8x1xf32>
    %23 = vector.extract_strided_slice %15 {offsets = [0, 0], sizes = [8, 1], strides = [1, 1]} : vector<32x1xf32> to vector<8x1xf32>
    %24 = vector.extract_strided_slice %15 {offsets = [8, 0], sizes = [8, 1], strides = [1, 1]} : vector<32x1xf32> to vector<8x1xf32>
    %25 = arith.addf %23, %24 : vector<8x1xf32>
    %26 = vector.extract_strided_slice %15 {offsets = [16, 0], sizes = [8, 1], strides = [1, 1]} : vector<32x1xf32> to vector<8x1xf32>
    %27 = arith.addf %25, %26 : vector<8x1xf32>
    %28 = vector.extract_strided_slice %15 {offsets = [24, 0], sizes = [8, 1], strides = [1, 1]} : vector<32x1xf32> to vector<8x1xf32>
    %29 = arith.addf %27, %28 : vector<8x1xf32>
    %cst_12 = arith.constant 2.500000e-01 : f32
    %30 = vector.broadcast %cst_12 : f32 to vector<8x1xf32>
    %31 = arith.mulf %22, %30 : vector<8x1xf32>
    %cst_13 = arith.constant 2.500000e-01 : f32
    %32 = vector.broadcast %cst_13 : f32 to vector<8x1xf32>
    %33 = arith.mulf %29, %32 : vector<8x1xf32>
    %34 = arith.mulf %31, %31 : vector<8x1xf32>
    %35 = arith.subf %33, %34 : vector<8x1xf32>
    %cst_14 = arith.constant 0.000000e+00 : f32
    %36 = vector.broadcast %cst_14 : f32 to vector<8x1xf32>
    %37 = arith.maximumf %35, %36 : vector<8x1xf32>
    %cst_15 = arith.constant 9.99999974E-6 : f32
    %38 = vector.broadcast %cst_15 : f32 to vector<8x1xf32>
    %39 = arith.addf %37, %38 : vector<8x1xf32>
    %40 = math.rsqrt %39 : vector<8x1xf32>
    %41 = tpu.concatenate %31, %31, %31, %31 in 0 : vector<8x1xf32>, vector<8x1xf32>, vector<8x1xf32>, vector<8x1xf32> -> vector<32x1xf32>
    %42 = tpu.concatenate %40, %40, %40, %40 in 0 : vector<8x1xf32>, vector<8x1xf32>, vector<8x1xf32>, vector<8x1xf32> -> vector<32x1xf32>
    %43 = arith.subf %10, %41 : vector<32x1xf32>
    %44 = arith.mulf %43, %42 : vector<32x1xf32>
    %c0_16 = arith.constant 0 : index
    %45 = memref.load %arg5[%c0_16] : memref<1xf32, #tpu.memory_space<smem>>
    %cst_17 = arith.constant 0.000000e+00 : f32
    %46 = vector.broadcast %cst_17 : f32 to vector<32x1xf32>
    %47 = arith.cmpf oge, %44, %46 : vector<32x1xf32>
    %48 = vector.broadcast %45 : f32 to vector<32x1xf32>
    %49 = arith.mulf %48, %44 : vector<32x1xf32>
    %50 = arith.select %47, %44, %49 : vector<32x1xi1>, vector<32x1xf32>
    %c0_18 = arith.constant 0 : index
    %c0_19 = arith.constant 0 : index
    %c0_20 = arith.constant 0 : index
    %51 = vector.load %arg6[%c0_18, %c0_19, %c0_20] : memref<1x32x1xf32, #tpu.memory_space<vmem>>, vector<1x32x1xf32>
    %52 = vector.shape_cast %51 : vector<1x32x1xf32> to vector<32x1xf32>
    %53 = vector.shape_cast %50 : vector<32x1xf32> to vector<1x32x1xf32>
    tpu.vector_store %arg6[%c0_18, %c0_19, %c0_20], %53 {strides = array<i32>} : memref<1x32x1xf32, #tpu.memory_space<vmem>>, vector<1x32x1xf32>,
    return
  }
  func.func @transform_0(%arg0: i32) -> (i32, i32, i32) {
    %c0_i32 = arith.constant 0 : i32
    %c0_i32_0 = arith.constant 0 : i32
    %c0_i32_1 = arith.constant 0 : i32
    return %arg0, %c0_i32, %c0_i32_0 : i32, i32, i32
  }
  func.func @transform_1(%arg0: i32) -> (i32, i32, i32) {
    %c0_i32 = arith.constant 0 : i32
    %c0_i32_0 = arith.constant 0 : i32
    %c0_i32_1 = arith.constant 0 : i32
    return %arg0, %c0_i32, %c0_i32_0 : i32, i32, i32
  }
  func.func @transform_2(%arg0: i32) -> (i32, i32) {
    %c0_i32 = arith.constant 0 : i32
    %c0_i32_0 = arith.constant 0 : i32
    %c0_i32_1 = arith.constant 0 : i32
    return %c0_i32, %c0_i32_0 : i32, i32
  }
  func.func @transform_3(%arg0: i32) -> (i32, i32) {
    %c0_i32 = arith.constant 0 : i32
    %c0_i32_0 = arith.constant 0 : i32
    %c0_i32_1 = arith.constant 0 : i32
    return %c0_i32, %c0_i32_0 : i32, i32
  }
  func.func @transform_4(%arg0: i32) -> i32 {
    %c0_i32 = arith.constant 0 : i32
    %c0_i32_0 = arith.constant 0 : i32
    return %c0_i32 : i32
  }
  func.func @transform_5(%arg0: i32) -> (i32, i32, i32) {
    %c0_i32 = arith.constant 0 : i32
    %c0_i32_0 = arith.constant 0 : i32
    %c0_i32_1 = arith.constant 0 : i32
    return %arg0, %c0_i32, %c0_i32_0 : i32, i32, i32
  }
}

</mosaic_0001>

<llo_original>
// kernel: tpu_custom_call.1
$region0: #{tpu_custom_call.1}
  #allocation0 [shape = 'u32[]', space=smem, size = 0x4, offset = 0x4, fixed_abs, tag = 'smem constant byte address 0x4 - core index']
  #allocation1 [shape = 'u32[144,128]{1,0:T(1,128)}', space=vmem, size = 0x12000, scoped, tag = 'internal scratch']
  #allocation2 [shape = 'f32[1]{0:T(128)S(6)}', space=smem, size = 0x200, scoped, tag = 'scoped memory for tpu_custom_call.1']
  %s0 = inlined_call_operand.vmem [shape: f32[2,16,1], index: 0, kind: input, shape index: {}]
  %s1 = inlined_call_operand.vmem [shape: f32[2,8,1], index: 1, kind: input, shape index: {}]
  %s2 = inlined_call_operand.vmem [shape: f32[2,1], index: 2, kind: input, shape index: {}]
  %s3 = inlined_call_operand.vmem [shape: f32[32,96], index: 3, kind: input, shape index: {}]
  %s4 = inlined_call_operand.<no memory space> [shape: f32[1], index: 4, kind: input, shape index: {}]
  %s5 = inlined_call_operand.vmem [shape: f32[2,32,1], index: 5, kind: output, shape index: {}]
  %s6 = sld [smem:[#allocation0]]
  $region53: #{tpu_custom_call.1} parent=0
    _
  %s8 = ssub.s32 1, %s6
  %s9 = scalar_select 0, %s8, %s6
  %10 = sst [smem:[#allocation2]] %s4
  loop: start=0, step=1, limit=4
  $region2: #{tpu_custom_call.1} parent=0 // loop_pre_header
    _
  $region3: #{tpu_custom_call.1} parent=0 // loop_header
    %s12 = sphi 0, %s16
    %p13 = scmp.ge.s32.totalorder %s12, 4
    %s22 = sphi 0, %s24
    %s25 = sphi 0, %s22
    %s26 = sphi 0, %s25
    %s42 = sphi 0, %s26
    %s48 = sphi 0, %s50
    %s51 = sphi 0, %s48
    %s52 = sphi 0, %s51
    %s68 = sphi 0, %s52
    %s72 = sphi 0, %s72
    %s74 = sphi 0, %s72
    %s75 = sphi 0, %s74
    %s89 = sphi 0, %s75
    %s93 = sphi 0, %s93
    %s95 = sphi 0, %s93
    %s96 = sphi 0, %s95
    %s110 = sphi 0, %s96
    %s114 = sphi 0, %s114
    %s116 = sphi 0, %s114
    %s117 = sphi 0, %s116
    %s131 = sphi 0, %s117
    %s137 = sphi 0, %s139
    %s140 = sphi 0, %s137
    %s141 = sphi 0, %s140
    %s157 = sphi 0, %s141
  $region4: #{tpu_custom_call.1} parent=0 // loop_header_branch
    %15 = sbr.rel (%p13) target = $region8
  $region5: #{tpu_custom_call.1} parent=0 // loop_body
    %s17 = ssub.s32 %s12, 1
    %s18 = ssub.s32 %s12, 2
    %s19 = sadd.s32 %s12, 1
    %s20 = ssub.s32 %s12, %s19
    %p21 = scmp.eq.s32.totalorder %s20, 0
    %s23 = sadd.s32 %s22, 1
    %s24 = scalar_select %p21, %s22, %s23
    %p27 = pneg %p21
    %p28 = scmp.eq.s32.totalorder %s12, 1
    %p29 = por %p27, %p28
    %p30 = scmp.ne.s32.totalorder %s22, %s25
    %p31 = scmp.eq.s32.totalorder %s12, 0
    %p32 = por %p30, %p31
    %p33 = scmp.ne.s32.totalorder %s22, %s25
    %p34 = scmp.eq.s32.totalorder %s17, 1
    %p35 = por %p33, %p34
    %p36 = scmp.ne.s32.totalorder %s25, %s26
    %p37 = scmp.eq.s32.totalorder %s17, 0
    %p38 = por %p36, %p37
    %p39 = scmp.ne.s32.totalorder %s25, %s26
    %p40 = scmp.eq.s32.totalorder %s18, 1
    %p41 = por %p39, %p40
    %p43 = scmp.ne.s32.totalorder %s26, %s42
    %p44 = scmp.eq.s32.totalorder %s18, 0
    %p45 = por %p43, %p44
    %s46 = ssub.s32 %s12, %s19
    %p47 = scmp.eq.s32.totalorder %s46, 0
    %s49 = sadd.s32 %s48, 1
    %s50 = scalar_select %p47, %s48, %s49
    %p53 = pneg %p47
    %p54 = scmp.eq.s32.totalorder %s12, 1
    %p55 = por %p53, %p54
    %p56 = scmp.ne.s32.totalorder %s48, %s51
    %p57 = scmp.eq.s32.totalorder %s12, 0
    %p58 = por %p56, %p57
    %p59 = scmp.ne.s32.totalorder %s48, %s51
    %p60 = scmp.eq.s32.totalorder %s17, 1
    %p61 = por %p59, %p60
    %p62 = scmp.ne.s32.totalorder %s51, %s52
    %p63 = scmp.eq.s32.totalorder %s17, 0
    %p64 = por %p62, %p63
    %p65 = scmp.ne.s32.totalorder %s51, %s52
    %p66 = scmp.eq.s32.totalorder %s18, 1
    %p67 = por %p65, %p66
    %p69 = scmp.ne.s32.totalorder %s52, %s68
    %p70 = scmp.eq.s32.totalorder %s18, 0
    %p71 = por %p69, %p70
    %s73 = sadd.s32 %s72, 1
    %p76 = scmp.eq.s32.totalorder %s12, 1
    %p77 = scmp.ne.s32.totalorder %s72, %s74
    %p78 = scmp.eq.s32.totalorder %s12, 0
    %p79 = por %p77, %p78
    %p80 = scmp.ne.s32.totalorder %s72, %s74
    %p81 = scmp.eq.s32.totalorder %s17, 1
    %p82 = por %p80, %p81
    %p83 = scmp.ne.s32.totalorder %s74, %s75
    %p84 = scmp.eq.s32.totalorder %s17, 0
    %p85 = por %p83, %p84
    %p86 = scmp.ne.s32.totalorder %s74, %s75
    %p87 = scmp.eq.s32.totalorder %s18, 1
    %p88 = por %p86, %p87
    %p90 = scmp.ne.s32.totalorder %s75, %s89
    %p91 = scmp.eq.s32.totalorder %s18, 0
    %p92 = por %p90, %p91
    %s94 = sadd.s32 %s93, 1
    %p97 = scmp.eq.s32.totalorder %s12, 1
    %p98 = scmp.ne.s32.totalorder %s93, %s95
    %p99 = scmp.eq.s32.totalorder %s12, 0
    %p100 = por %p98, %p99
    %p101 = scmp.ne.s32.totalorder %s93, %s95
    %p102 = scmp.eq.s32.totalorder %s17, 1
    %p103 = por %p101, %p102
    %p104 = scmp.ne.s32.totalorder %s95, %s96
    %p105 = scmp.eq.s32.totalorder %s17, 0
    %p106 = por %p104, %p105
    %p107 = scmp.ne.s32.totalorder %s95, %s96
    %p108 = scmp.eq.s32.totalorder %s18, 1
    %p109 = por %p107, %p108
    %p111 = scmp.ne.s32.totalorder %s96, %s110
    %p112 = scmp.eq.s32.totalorder %s18, 0
    %p113 = por %p111, %p112
    %s115 = sadd.s32 %s114, 1
    %p118 = scmp.eq.s32.totalorder %s12, 1
    %p119 = scmp.ne.s32.totalorder %s114, %s116
    %p120 = scmp.eq.s32.totalorder %s12, 0
    %p121 = por %p119, %p120
    %p122 = scmp.ne.s32.totalorder %s114, %s116
    %p123 = scmp.eq.s32.totalorder %s17, 1
    %p124 = por %p122, %p123
    %p125 = scmp.ne.s32.totalorder %s116, %s117
    %p126 = scmp.eq.s32.totalorder %s17, 0
    %p127 = por %p125, %p126
    %p128 = scmp.ne.s32.totalorder %s116, %s117
    %p129 = scmp.eq.s32.totalorder %s18, 1
    %p130 = por %p128, %p129
    %p132 = scmp.ne.s32.totalorder %s117, %s131
    %p133 = scmp.eq.s32.totalorder %s18, 0
    %p134 = por %p132, %p133
    %s135 = ssub.s32 %s12, %s19
    %p136 = scmp.eq.s32.totalorder %s135, 0
    %s138 = sadd.s32 %s137, 1
    %s139 = scalar_select %p136, %s137, %s138
    %p142 = pneg %p136
    %p143 = scmp.eq.s32.totalorder %s12, 1
    %p144 = por %p142, %p143
    %p145 = scmp.ne.s32.totalorder %s137, %s140
    %p146 = scmp.eq.s32.totalorder %s12, 0
    %p147 = por %p145, %p146
    %p148 = scmp.ne.s32.totalorder %s137, %s140
    %p149 = scmp.eq.s32.totalorder %s17, 1
    %p150 = por %p148, %p149
    %p151 = scmp.ne.s32.totalorder %s140, %s141
    %p152 = scmp.eq.s32.totalorder %s17, 0
    %p153 = por %p151, %p152
    %p154 = scmp.ne.s32.totalorder %s140, %s141
    %p155 = scmp.eq.s32.totalorder %s18, 1
    %p156 = por %p154, %p155
    %p158 = scmp.ne.s32.totalorder %s141, %s157
    %p159 = scmp.eq.s32.totalorder %s18, 0
    %p160 = por %p158, %p159
    %p161 = scmp.le.s32.totalorder 1, %s12
    %p162 = scmp.lt.s32.totalorder %s12, 3
    %p163 = pnand %p161, %p162
    %p164 = pneg %p163
    // Predicated region
    $region9: #{tpu_custom_call.1} parent=5 // pred_check
      _
    $region10: #{tpu_custom_call.1} parent=5 // pred_check_branch
      %166 = sbr.rel (%p163) target = $region12
    $region11: #{tpu_custom_call.1} parent=5 // pred_region
      %s167 = ssub.s32 %s12, 1
      // Predicated region
      $region13: #{tpu_custom_call.1} parent=11 // pred_check
        %p168 = pneg %p85
      $region14: #{tpu_custom_call.1} parent=11 // pred_check_branch
        %170 = sbr.rel (%p168) target = $region16
      $region15: #{tpu_custom_call.1} parent=11 // pred_region
        _
      $region16: #{tpu_custom_call.1} parent=11 // pred_fallthru
        _
      // Predicated region
      $region17: #{tpu_custom_call.1} parent=11 // pred_check
        %p171 = pneg %p106
      $region18: #{tpu_custom_call.1} parent=11 // pred_check_branch
        %173 = sbr.rel (%p171) target = $region20
      $region19: #{tpu_custom_call.1} parent=11 // pred_region
        _
      $region20: #{tpu_custom_call.1} parent=11 // pred_fallthru
        _
      // Predicated region
      $region21: #{tpu_custom_call.1} parent=11 // pred_check
        %p174 = pneg %p127
      $region22: #{tpu_custom_call.1} parent=11 // pred_check_branch
        %176 = sbr.rel (%p174) target = $region24
      $region23: #{tpu_custom_call.1} parent=11 // pred_region
        _
      $region24: #{tpu_custom_call.1} parent=11 // pred_fallthru
        _
    $region12: #{tpu_custom_call.1} parent=5 // pred_fallthru
      _
    %p177 = scmp.lt.s32.totalorder %s12, 2
    // Predicated region
    $region25: #{tpu_custom_call.1} parent=5 // pred_check
      %p178 = pneg %p177
    $region26: #{tpu_custom_call.1} parent=5 // pred_check_branch
      %180 = sbr.rel (%p178) target = $region28
    $region27: #{tpu_custom_call.1} parent=5 // pred_region
      // Predicated region
      $region29: #{tpu_custom_call.1} parent=27 // pred_check
        %p181 = pneg %p32
      $region30: #{tpu_custom_call.1} parent=27 // pred_check_branch
        %183 = sbr.rel (%p181) target = $region32
      $region31: #{tpu_custom_call.1} parent=27 // pred_region
        %p184 = scmp.lt.s32.totalorder %s12, 1
        %s185 = scalar_select %p184, %s12, 1
        %s186 = smul.addr %s185, 2
        %s187 = smul.addr %s186, 8
        %s188 = scalar_lea.vmem %s0, %s187
      $region32: #{tpu_custom_call.1} parent=27 // pred_fallthru
        _
      // Predicated region
      $region33: #{tpu_custom_call.1} parent=27 // pred_check
        %p189 = pneg %p58
      $region34: #{tpu_custom_call.1} parent=27 // pred_check_branch
        %191 = sbr.rel (%p189) target = $region36
      $region35: #{tpu_custom_call.1} parent=27 // pred_region
        %p192 = scmp.lt.s32.totalorder %s12, 1
        %s193 = scalar_select %p192, %s12, 1
        %s194 = smul.addr %s193, 8
        %s195 = scalar_lea.vmem %s1, %s194
      $region36: #{tpu_custom_call.1} parent=27 // pred_fallthru
        _
    $region28: #{tpu_custom_call.1} parent=5 // pred_fallthru
      _
    %p196 = scmp.le.s32.totalorder 1, %s12
    %p197 = scmp.lt.s32.totalorder %s12, 3
    %p198 = pnand %p196, %p197
    %p199 = pneg %p198
    // Predicated region
    $region37: #{tpu_custom_call.1} parent=5 // pred_check
      _
    $region38: #{tpu_custom_call.1} parent=5 // pred_check_branch
      %201 = sbr.rel (%p198) target = $region40
    $region39: #{tpu_custom_call.1} parent=5 // pred_region
      %s202 = ssub.s32 %s12, 1
      %p203 = scmp.lt.s32.totalorder %s17, 1
      %s204 = scalar_select %p203, %s17, 1
      %s205 = smul.addr %s204, 2
      %s206 = smul.addr %s205, 8
      %s207 = scalar_lea.vmem %s0, %s206
      %p208 = pneg %p38
      %p209 = pneg %p35
      %p210 = scmp.lt.s32.totalorder %s17, 1
      %s211 = scalar_select %p210, %s17, 1
      %s212 = smul.addr %s211, 8
      %s213 = scalar_lea.vmem %s1, %s212
      %p214 = pneg %p64
      %p215 = pneg %p61
      %p216 = pneg %p85
      %p217 = pneg %p82
      %p218 = pneg %p106
      %p219 = pneg %p103
      %p220 = pneg %p127
      %p221 = pneg %p124
      %p222 = pneg %p153
      %p223 = pneg %p150
      %p224 = scmp.lt.s32.totalorder %s17, 1
      %s225 = scalar_select %p224, %s17, 1
      %s226 = smul.addr %s225, 4
      %s227 = smul.addr %s226, 8
      %s228 = scalar_lea.vmem %s5, %s227
      %p229 = scmp.lt.s32.totalorder %s17, 1
      %s230 = scalar_select %p229, %s17, 1
      %s231 = smul.addr %s230, 2
      %s232 = smul.addr %s231, 8
      %s233 = scalar_lea.vmem %s0, %s232
      %p234 = scmp.lt.s32.totalorder %s17, 1
      %s235 = scalar_select %p234, %s17, 1
      %s236 = smul.addr %s235, 8
      %s237 = scalar_lea.vmem %s1, %s236
      %p238 = scmp.lt.s32.totalorder %s17, 1
      %s239 = scalar_select %p238, %s17, 1
      %s240 = smul.addr %s239, 4
      %s241 = smul.addr %s240, 8
      %s242 = scalar_lea.vmem %s5, %s241
      %v243 = vld [vmem:[%s233] sm:$0xff]
      %v244 = vld [vmem:[%s233 + $0x8] sm:$0xff]
      %v245 = vld [vmem:[%s237] sm:$0xff]
      %v246 = vld [vmem:[%s3] sm:$0xff]
      %v247 = vld [vmem:[%s3 + $0x8] sm:$0xff]
      %v248 = vld [vmem:[%s3 + $0x10] sm:$0xff]
      %v249 = vld [vmem:[%s3 + $0x18] sm:$0xff]
      %vm250 = vcmask 785408
      %v252 = vsel %vm250, %v246, 0
      %v255 = vsel %vm250, %v247, 0
      %v258 = vsel %vm250, %v248, 0
      %v261 = vsel %vm250, %v249, 0
      %263 = vmatprep.subr.mxu0 0.0
      %264 = vmatpush1.msra.mxu0 %v243
      %265 = vmatprep.subr.mxu0 0.0
      %266 = vmatpush1.msra.mxu0 %v244
      %267 = vmatprep.subr.mxu0 0.0
      %268 = vmatpush1.msra.mxu0 %v245
      %269 = vmatprep.subr.mxu0 0.0
      %270 = vmatpush1.msra.mxu0 0.0
      %271 = vmatprep.subr.mxu0 0.0
      %272 = vmatpush1.msra.mxu0 0.0
      %273 = vmatprep.subr.mxu0 0.0
      %274 = vmatpush1.msra.mxu0 0.0
      %275 = vmatprep.subr.mxu0 0.0
      %276 = vmatpush1.msra.mxu0 0.0
      %277 = vmatprep.subr.mxu0 0.0
      %278 = vmatpush1.msra.mxu0 0.0
      %279 = vmatprep.subr.mxu0 0.0
      %280 = vmatpush1.msra.mxu0 0.0
      %281 = vmatprep.subr.mxu0 0.0
      %282 = vmatpush1.msra.mxu0 0.0
      %283 = vmatprep.subr.mxu0 0.0
      %284 = vmatpush1.msra.mxu0 0.0
      %285 = vmatprep.subr.mxu0 0.0
      %286 = vmatpush1.msra.mxu0 0.0
      %287 = vmatprep.subr.mxu0 0.0
      %288 = vmatpush1.msra.mxu0 0.0
      %289 = vmatprep.subr.mxu0 0.0
      %290 = vmatpush1.msra.mxu0 0.0
      %291 = vmatprep.subr.mxu0 0.0
      %292 = vmatpush1.msra.mxu0 0.0
      %293 = vmatprep.subr.mxu0 0.0
      %294 = vmatpush1.msra.mxu0 0.0
      %295 = vmatprep.subr.mxu0 0.0
      %296 = vmatpush1.msra.mxu0 0.0
      %297 = vmatprep.subr.mxu0 0.0
      %298 = vmatpush1.msra.mxu0 0.0
      %299 = vmatprep.subr.mxu0 0.0
      %300 = vmatpush1.msra.mxu0 0.0
      %301 = vmatprep.subr.mxu0 0.0
      %302 = vmatpush1.msra.mxu0 0.0
      %303 = vmatprep.subr.mxu0 0.0
      %304 = vmatpush1.msra.mxu0 0.0
      %305 = vmatprep.subr.mxu0 0.0
      %306 = vmatpush1.msra.mxu0 0.0
      %307 = vmatprep.subr.mxu0 0.0
      %308 = vmatpush1.msra.mxu0 0.0
      %309 = vmatprep.subr.mxu0 0.0
      %310 = vmatpush1.msra.mxu0 0.0
      %311 = vmatprep.subr.mxu0 0.0
      %312 = vmatpush1.msra.mxu0 0.0
      %313 = vmatprep.subr.mxu0 0.0
      %314 = vmatpush1.msra.mxu0 0.0
      %315 = vmatprep.subr.mxu0 0.0
      %316 = vmatpush1.msra.mxu0 0.0
      %317 = vmatprep.subr.mxu0 0.0
      %318 = vmatpush1.msra.mxu0 0.0
      %319 = vmatprep.subr.mxu0 0.0
      %320 = vmatpush1.msra.mxu0 0.0
      %321 = vmatprep.subr.mxu0 0.0
      %322 = vmatpush1.msra.mxu0 0.0
      %323 = vmatprep.subr.mxu0 0.0
      %324 = vmatpush1.msra.mxu0 0.0
      %325 = vmatprep.subr.mxu0 0.0
      %326 = vmatpush1.msra.mxu0 0.0
      %327 = vmatprep.mubr.f32.mxu0 0.0
      %328 = vmatmul.mubr.f32.gmra.mrb[0].mxu0 %v252
      %v329 = vpop.f32.mrb[0].mxu0
      %v330 = vadd.f32 0.0, %v329
      %v331 = vpop.f32.mrb[0].mxu0
      %332 = vmatprep.mubr.f32.mxu0 0.0
      %333 = vmatmul.mubr.f32.gmra.mrb[0].mxu0 %v255
      %v334 = vpop.f32.mrb[0].mxu0
      %v335 = vadd.f32 0.0, %v334
      %v336 = vpop.f32.mrb[0].mxu0
      %337 = vmatprep.mubr.f32.mxu0 0.0
      %338 = vmatmul.mubr.f32.gmra.mrb[0].mxu0 %v258
      %v339 = vpop.f32.mrb[0].mxu0
      %v340 = vadd.f32 0.0, %v339
      %v341 = vpop.f32.mrb[0].mxu0
      %342 = vmatprep.mubr.f32.mxu0 0.0
      %343 = vmatmul.mubr.f32.gmra.mrb[0].mxu0 %v261
      %v344 = vpop.f32.mrb[0].mxu0
      %v345 = vadd.f32 0.0, %v344
      %v346 = vpop.f32.mrb[0].mxu0
      %347 = vdwg.mxu0
      %v348 = vadd.f32 %v330, 0.0
      %v349 = vadd.f32 %v335, 0.0
      %v350 = vadd.f32 %v340, 0.0
      %v351 = vadd.f32 %v345, 0.0
      %v352 = vmul.f32 %v330, %v330
      %v353 = vmul.f32 %v335, %v335
      %v354 = vmul.f32 %v340, %v340
      %v355 = vmul.f32 %v345, %v345
      %v356 = vadd.f32 %v352, 0.0
      %v357 = vadd.f32 %v353, 0.0
      %v358 = vadd.f32 %v354, 0.0
      %v359 = vadd.f32 %v355, 0.0
      %v360 = vadd.f32 %v348, %v349
      %v361 = vadd.f32 %v360, %v350
      %v362 = vadd.f32 %v361, %v351
      %v363 = vadd.f32 %v356, %v357
      %v364 = vadd.f32 %v363, %v358
      %v365 = vadd.f32 %v364, %v359
      %v366 = vmul.f32 %v362, 0.25
      %v367 = vmul.f32 %v365, 0.25
      %v368 = vmul.f32 %v366, %v366
      %v369 = vsub.f32 %v367, %v368
      %v370 = vmax.f32 %v369, 0.0
      %v371 = vadd.f32 %v370, 1e-05
      %v372 = vrsqrt.pop %v371
      %v373 = vsub.f32 %v330, %v366
      %v374 = vsub.f32 %v335, %v366
      %v375 = vsub.f32 %v340, %v366
      %v376 = vsub.f32 %v345, %v366
      %v377 = vmul.f32 %v373, %v372
      %v378 = vmul.f32 %v374, %v372
      %v379 = vmul.f32 %v375, %v372
      %v380 = vmul.f32 %v376, %v372
      %s381 = sld [smem:[#allocation2]]
      %vm382 = vcmp.ge.f32.partialorder %v377, 0.0
      %vm383 = vcmp.ge.f32.partialorder %v378, 0.0
      %vm384 = vcmp.ge.f32.partialorder %v379, 0.0
      %vm385 = vcmp.ge.f32.partialorder %v380, 0.0
      %v386 = vstv %s381
      %v387 = vmul.f32 %v386, %v377
      %v388 = vmul.f32 %v386, %v378
      %v389 = vmul.f32 %v386, %v379
      %v390 = vmul.f32 %v386, %v380
      %v391 = vsel %vm382, %v377, %v387
      %v392 = vsel %vm383, %v378, %v388
      %v393 = vsel %vm384, %v379, %v389
      %v394 = vsel %vm385, %v380, %v390
      %vm395 = vcmask 7168
      %396 = vst.msk [vmem:[%s242] sm:$0xff] %vm395, %v391
      %397 = vst.msk [vmem:[%s242 + $0x8] sm:$0xff] %vm395, %v392
      %398 = vst.msk [vmem:[%s242 + $0x10] sm:$0xff] %vm395, %v393
      %399 = vst.msk [vmem:[%s242 + $0x18] sm:$0xff] %vm395, %v394
      %p400 = scmp.lt.s32.totalorder %s17, 1
      %s401 = scalar_select %p400, %s17, 1
      %s402 = smul.addr %s401, 4
      %s403 = smul.addr %s402, 8
      %s404 = scalar_lea.vmem %s5, %s403
      // Predicated region
      $region41: #{tpu_custom_call.1} parent=39 // pred_check
        %p405 = pneg %p150
      $region42: #{tpu_custom_call.1} parent=39 // pred_check_branch
        %407 = sbr.rel (%p405) target = $region44
      $region43: #{tpu_custom_call.1} parent=39 // pred_region
        _
      $region44: #{tpu_custom_call.1} parent=39 // pred_fallthru
        _
    $region40: #{tpu_custom_call.1} parent=5 // pred_fallthru
      _
    %p408 = scmp.le.s32.totalorder 2, %s12
    // Predicated region
    $region45: #{tpu_custom_call.1} parent=5 // pred_check
      %p409 = pneg %p408
    $region46: #{tpu_custom_call.1} parent=5 // pred_check_branch
      %411 = sbr.rel (%p409) target = $region48
    $region47: #{tpu_custom_call.1} parent=5 // pred_region
      %s412 = ssub.s32 %s12, 2
      // Predicated region
      $region49: #{tpu_custom_call.1} parent=47 // pred_check
        %p413 = pneg %p156
      $region50: #{tpu_custom_call.1} parent=47 // pred_check_branch
        %415 = sbr.rel (%p413) target = $region52
      $region51: #{tpu_custom_call.1} parent=47 // pred_region
        %p416 = scmp.lt.s32.totalorder %s18, 1
        %s417 = scalar_select %p416, %s18, 1
        %s418 = smul.addr %s417, 4
        %s419 = smul.addr %s418, 8
        %s420 = scalar_lea.vmem %s5, %s419
      $region52: #{tpu_custom_call.1} parent=47 // pred_fallthru
        _
    $region48: #{tpu_custom_call.1} parent=5 // pred_fallthru
      _
  $region6: #{tpu_custom_call.1} parent=0 // loop_footer
    %s16 = sadd.s32 1, %s12
  $region7: #{tpu_custom_call.1} parent=0 // loop_footer_branch
    %11 = sbr.rel target = $region3
  $region8: #{tpu_custom_call.1} parent=0 // loop_exit
    _

</llo_original>
